<compile_context>
chip_gen: v5e
topology: v5e:2x2
jax: 0.10.0
libtpu: 0.0.40
codegen_flags: <defaults>
</compile_context>

<pallas_src>
import functools

import jax
import jax.numpy as jnp
from jax.experimental import pallas as pl
from jax.experimental.pallas import tpu as pltpu


def _mlp_kernel(x_ref, w1_ref, b1_ref, w2_ref, b2_ref, w3_ref, b3_ref, o_ref,
                *, activation):
    if activation == "relu":
        ac = lambda v: jnp.maximum(v, 0.0)
    elif activation == "tanh":
        ac = jnp.tanh
    else:
        raise RuntimeError("unsupported activation")

    cdt = w1_ref.dtype  # MXU input dtype (f32 or bf16); accumulation is f32.

    # x is streamed from HBM as f32; any narrowing cast happens here (hidden
    # under DMA/MXU) instead of in the wrapper.
    x = x_ref[...].astype(cdt)
    h1 = ac(jnp.dot(x, w1_ref[...], preferred_element_type=jnp.float32)
            + b1_ref[...])
    h2 = ac(jnp.dot(h1.astype(cdt), w2_ref[...],
                    preferred_element_type=jnp.float32) + b2_ref[...])
    o_ref[...] = (jnp.dot(h2.astype(cdt), w3_ref[...],
                          preferred_element_type=jnp.float32)
                  + b3_ref[...]).astype(o_ref.dtype)


def _pick_tile_b(B, requested, compute_dtype):
    """Row tile: big enough to amortize per-step overhead, small enough to
    keep >= ~4 grid steps (>= 2 per v7x TensorCore), aligned to the dtype's
    sublane row packing."""
    itemsize = jnp.dtype(compute_dtype).itemsize
    gran = 8 * (4 // itemsize)          # f32 -> 8 rows/vreg, bf16 -> 16
    tile = min(int(requested), max(gran, B // 4))
    tile = max(gran, (tile // gran) * gran)
    return tile


def waypoint_regressor(x, params, *, activation="relu", tile_b=2048,
                       compute_dtype=jnp.float32):
    """Forward pass of WaypointRegressor.

    x: [B, input_dim] float32.
    params: dict with w1 [D,H], b1 [1,H], w2 [H,H], b2 [1,H], w3 [H,O], b3 [1,O]
            (weights stored input-major, i.e. transposed from nn.Linear).
    compute_dtype: jnp.float32 (exact) or jnp.bfloat16 (faster MXU feed;
            f32 accumulation, x cast in-kernel so HBM traffic is unchanged).
    """
    B, D = x.shape
    w1, b1 = params["w1"], params["b1"]
    w2, b2 = params["w2"], params["b2"]
    w3, b3 = params["w3"], params["b3"]
    H = w1.shape[1]
    O = w3.shape[1]

    tile_b = _pick_tile_b(B, tile_b, compute_dtype)
    num_tiles = pl.cdiv(B, tile_b)      # partial last block handled by Pallas

    # Weights are tiny (~50 KB); casting them in the wrapper is fine.
    if compute_dtype != jnp.float32:
        w1c, w2c, w3c = (w1.astype(compute_dtype), w2.astype(compute_dtype),
                         w3.astype(compute_dtype))
    else:
        w1c, w2c, w3c = w1, w2, w3

    kernel = functools.partial(_mlp_kernel, activation=activation)

    w_itemsize = jnp.dtype(compute_dtype).itemsize
    weight_bytes = (D * H + H * H + H * O) * w_itemsize + (2 * H + O) * 4
    cost = pl.CostEstimate(
        flops=2 * B * (D * H + H * H + H * O),
        transcendentals=(2 * B * H if activation == "tanh" else 0),
        bytes_accessed=(B * D * 4            # x stream (always f32 in HBM)
                        + weight_bytes       # weights + biases
                        + B * O * 4),        # output (f32)
    )

    # Real VMEM need: double-buffered x tile (f32) + double-buffered output
    # tile + (double-buffered but never-refetched) weights/biases + f32
    # intermediates.  Only bump the scoped limit when it exceeds the most
    # conservative default (16 MiB on v5e), and never exceed 75% of the
    # chip's physical per-core VMEM (64 MiB on v7x).
    need = (2 * tile_b * D * 4 + 2 * tile_b * O * 4 + 2 * weight_bytes
            + 2 * tile_b * H * 4)
    vmem_limit = None
    if need > 12 * 1024 * 1024:
        try:
            cap = pltpu.get_tpu_info().vmem_capacity_bytes
        except Exception:
            cap = 64 * 1024 * 1024      # v7x per-TC: most conservative
        vmem_limit = min(int(need * 1.25), int(0.75 * cap))

    out = pl.pallas_call(
        kernel,
        out_shape=jax.ShapeDtypeStruct((B, O), jnp.float32),
        grid_spec=pltpu.PrefetchScalarGridSpec(
            num_scalar_prefetch=0,
            grid=(num_tiles,),
            in_specs=[
                pl.BlockSpec((tile_b, D), lambda i: (i, 0)),   # x tile
                pl.BlockSpec((D, H), lambda i: (0, 0)),        # w1 (resident)
                pl.BlockSpec((1, H), lambda i: (0, 0)),        # b1
                pl.BlockSpec((H, H), lambda i: (0, 0)),        # w2
                pl.BlockSpec((1, H), lambda i: (0, 0)),        # b2
                pl.BlockSpec((H, O), lambda i: (0, 0)),        # w3
                pl.BlockSpec((1, O), lambda i: (0, 0)),        # b3
            ],
            out_specs=pl.BlockSpec((tile_b, O), lambda i: (i, 0)),
        ),
        compiler_params=pltpu.CompilerParams(
            dimension_semantics=("parallel",),
            vmem_limit_bytes=vmem_limit),
        cost_estimate=cost,
    )(x, w1c, b1, w2c, b2, w3c, b3)

    return out


def _orthogonal(key, out_features, in_features, scale=1.0):
    """Mimics torch.nn.init.orthogonal_ on a [out, in] weight, then returns
    the [in, out] layout used by the kernel."""
    init = jax.nn.initializers.orthogonal(scale=scale)
    w_out_in = init(key, (out_features, in_features), jnp.float32)
    return w_out_in.T  # [in, out]


def init_waypoint_regressor_params(key, input_dim, out_dim=2, mid_dim=None,
                                   init_scale=1.0):
    if mid_dim is None:
        mid_dim = input_dim // 2
    k1, k2, k3 = jax.random.split(key, 3)
    return {
        "w1": _orthogonal(k1, mid_dim, input_dim, init_scale),
        "b1": jnp.zeros((1, mid_dim), jnp.float32),
        "w2": _orthogonal(k2, mid_dim, mid_dim, init_scale),
        "b2": jnp.zeros((1, mid_dim), jnp.float32),
        "w3": _orthogonal(k3, out_dim, mid_dim, init_scale),
        "b3": jnp.zeros((1, out_dim), jnp.float32),
    }


def _reference(x, params, activation="relu"):
    ac = jax.nn.relu if activation == "relu" else jnp.tanh
    h = ac(x @ params["w1"] + params["b1"])
    h = ac(h @ params["w2"] + params["b2"])
    return h @ params["w3"] + params["b3"]


if __name__ == "__main__":
    # Small shapes consistent with the module: input_dim=128 -> mid=64 -> out=2.
    # B=500 is deliberately ragged: tile_b clamps to 120 (>= 4 grid steps,
    # >= 2 per v7x TC) and the last block is a Pallas-masked partial block
    # (no wrapper-side padding pass over x).
    B, INPUT_DIM, OUT_DIM = 500, 128, 2

    key = jax.random.PRNGKey(0)
    kx, kp = jax.random.split(key)
    x = jax.random.normal(kx, (B, INPUT_DIM), dtype=jnp.float32)
    params = init_waypoint_regressor_params(kp, INPUT_DIM, OUT_DIM)

    # f32 path, relu: exact (matches the PyTorch module numerics).
    ref = _reference(x, params, activation="relu")
    out = jax.block_until_ready(waypoint_regressor(x, params, activation="relu"))
    assert out.shape == (B, OUT_DIM)
    assert jnp.allclose(out, ref, atol=1e-4, rtol=1e-4), "f32 relu mismatch"

    # f32 path, tanh activation.
    ref_t = _reference(x, params, activation="tanh")
    out_t = jax.block_until_ready(waypoint_regressor(x, params, activation="tanh"))
    assert jnp.allclose(out_t, ref_t, atol=1e-4, rtol=1e-4), "f32 tanh mismatch"

    # bf16 compute path: x cast in-kernel, f32 accumulation, looser tolerance.
    out_bf16 = jax.block_until_ready(
        waypoint_regressor(x, params, activation="relu",
                           compute_dtype=jnp.bfloat16))
    assert out_bf16.shape == (B, OUT_DIM)
    assert bool(jnp.all(jnp.isfinite(out_bf16)))
    assert jnp.allclose(out_bf16, ref, atol=1e-1, rtol=1e-1), "bf16 mismatch"

    print("KERNEL_OK")
</pallas_src>

<mosaic_0001>
module attributes {stable_mosaic.version = 11 : i64} {
  func.func @_mlp_kernel(%arg0: i32, %arg1: memref<120x128xf32, #tpu.memory_space<vmem>>, %arg2: memref<128x64xf32, #tpu.memory_space<vmem>>, %arg3: memref<1x64xf32, #tpu.memory_space<vmem>>, %arg4: memref<64x64xf32, #tpu.memory_space<vmem>>, %arg5: memref<1x64xf32, #tpu.memory_space<vmem>>, %arg6: memref<64x2xf32, #tpu.memory_space<vmem>>, %arg7: memref<1x2xf32, #tpu.memory_space<vmem>>, %arg8: memref<120x2xf32, #tpu.memory_space<vmem>>) attributes {dimension_semantics = [#tpu.dimension_semantics<parallel>], iteration_bounds = array<i64: 5>, scalar_prefetch = 0 : i64, scratch_operands = 0 : i64, tpu.core_type = #tpu.core_type<tc>, window_params = [{transform_indices = @transform_0, window_bounds = array<i64: 120, 128>}, {pipeline_mode = #tpu.pipeline_mode<synchronous>, transform_indices = @transform_1, window_bounds = array<i64: 128, 64>}, {pipeline_mode = #tpu.pipeline_mode<synchronous>, transform_indices = @transform_2, window_bounds = array<i64: 1, 64>}, {pipeline_mode = #tpu.pipeline_mode<synchronous>, transform_indices = @transform_3, window_bounds = array<i64: 64, 64>}, {pipeline_mode = #tpu.pipeline_mode<synchronous>, transform_indices = @transform_4, window_bounds = array<i64: 1, 64>}, {pipeline_mode = #tpu.pipeline_mode<synchronous>, transform_indices = @transform_5, window_bounds = array<i64: 64, 2>}, {pipeline_mode = #tpu.pipeline_mode<synchronous>, transform_indices = @transform_6, window_bounds = array<i64: 1, 2>}, {transform_indices = @transform_7, window_bounds = array<i64: 120, 2>}]} {
    %c0 = arith.constant 0 : index
    %c0_0 = arith.constant 0 : index
    %0 = vector.load %arg1[%c0, %c0_0] : memref<120x128xf32, #tpu.memory_space<vmem>>, vector<120x128xf32>
    %c0_1 = arith.constant 0 : index
    %c0_2 = arith.constant 0 : index
    %1 = vector.load %arg2[%c0_1, %c0_2] : memref<128x64xf32, #tpu.memory_space<vmem>>, vector<128x64xf32>
    %cst = arith.constant dense<0.000000e+00> : vector<120x64xf32>
    %2 = tpu.matmul %0, %1, %cst {dimension_numbers = #tpu.dot_dimension_numbers<[1], [0], [0], [1], [0, 0, 1, 1], [], []>} : vector<120x128xf32>, vector<128x64xf32>, vector<120x64xf32> -> vector<120x64xf32>
    %c0_3 = arith.constant 0 : index
    %c0_4 = arith.constant 0 : index
    %3 = vector.load %arg3[%c0_3, %c0_4] : memref<1x64xf32, #tpu.memory_space<vmem>>, vector<1x64xf32>
    %4 = vector.broadcast %3 : vector<1x64xf32> to vector<120x64xf32>
    %5 = arith.addf %2, %4 : vector<120x64xf32>
    %cst_5 = arith.constant 0.000000e+00 : f32
    %6 = vector.broadcast %cst_5 : f32 to vector<120x64xf32>
    %7 = arith.maximumf %5, %6 : vector<120x64xf32>
    %c0_6 = arith.constant 0 : index
    %c0_7 = arith.constant 0 : index
    %8 = vector.load %arg4[%c0_6, %c0_7] : memref<64x64xf32, #tpu.memory_space<vmem>>, vector<64x64xf32>
    %cst_8 = arith.constant dense<0.000000e+00> : vector<120x64xf32>
    %9 = tpu.matmul %7, %8, %cst_8 {dimension_numbers = #tpu.dot_dimension_numbers<[1], [0], [0], [1], [0, 0, 1, 1], [], []>} : vector<120x64xf32>, vector<64x64xf32>, vector<120x64xf32> -> vector<120x64xf32>
    %c0_9 = arith.constant 0 : index
    %c0_10 = arith.constant 0 : index
    %10 = vector.load %arg5[%c0_9, %c0_10] : memref<1x64xf32, #tpu.memory_space<vmem>>, vector<1x64xf32>
    %11 = vector.broadcast %10 : vector<1x64xf32> to vector<120x64xf32>
    %12 = arith.addf %9, %11 : vector<120x64xf32>
    %cst_11 = arith.constant 0.000000e+00 : f32
    %13 = vector.broadcast %cst_11 : f32 to vector<120x64xf32>
    %14 = arith.maximumf %12, %13 : vector<120x64xf32>
    %c0_12 = arith.constant 0 : index
    %c0_13 = arith.constant 0 : index
    %15 = vector.load %arg6[%c0_12, %c0_13] : memref<64x2xf32, #tpu.memory_space<vmem>>, vector<64x2xf32>
    %cst_14 = arith.constant dense<0.000000e+00> : vector<120x2xf32>
    %16 = tpu.matmul %14, %15, %cst_14 {dimension_numbers = #tpu.dot_dimension_numbers<[1], [0], [0], [1], [0, 0, 1, 1], [], []>} : vector<120x64xf32>, vector<64x2xf32>, vector<120x2xf32> -> vector<120x2xf32>
    %c0_15 = arith.constant 0 : index
    %c0_16 = arith.constant 0 : index
    %17 = vector.load %arg7[%c0_15, %c0_16] : memref<1x2xf32, #tpu.memory_space<vmem>>, vector<1x2xf32>
    %18 = vector.broadcast %17 : vector<1x2xf32> to vector<120x2xf32>
    %19 = arith.addf %16, %18 : vector<120x2xf32>
    %c0_17 = arith.constant 0 : index
    %c0_18 = arith.constant 0 : index
    %20 = vector.load %arg8[%c0_17, %c0_18] : memref<120x2xf32, #tpu.memory_space<vmem>>, vector<120x2xf32>
    tpu.vector_store %arg8[%c0_17, %c0_18], %19 {strides = array<i32>} : memref<120x2xf32, #tpu.memory_space<vmem>>, vector<120x2xf32>,
    return
  }
  func.func @transform_0(%arg0: i32) -> (i32, i32) {
    %c0_i32 = arith.constant 0 : i32
    %c0_i32_0 = arith.constant 0 : i32
    return %arg0, %c0_i32 : i32, i32
  }
  func.func @transform_1(%arg0: i32) -> (i32, i32) {
    %c0_i32 = arith.constant 0 : i32
    %c0_i32_0 = arith.constant 0 : i32
    %c0_i32_1 = arith.constant 0 : i32
    return %c0_i32, %c0_i32_0 : i32, i32
  }
  func.func @transform_2(%arg0: i32) -> (i32, i32) {
    %c0_i32 = arith.constant 0 : i32
    %c0_i32_0 = arith.constant 0 : i32
    %c0_i32_1 = arith.constant 0 : i32
    return %c0_i32, %c0_i32_0 : i32, i32
  }
  func.func @transform_3(%arg0: i32) -> (i32, i32) {
    %c0_i32 = arith.constant 0 : i32
    %c0_i32_0 = arith.constant 0 : i32
    %c0_i32_1 = arith.constant 0 : i32
    return %c0_i32, %c0_i32_0 : i32, i32
  }
  func.func @transform_4(%arg0: i32) -> (i32, i32) {
    %c0_i32 = arith.constant 0 : i32
    %c0_i32_0 = arith.constant 0 : i32
    %c0_i32_1 = arith.constant 0 : i32
    return %c0_i32, %c0_i32_0 : i32, i32
  }
  func.func @transform_5(%arg0: i32) -> (i32, i32) {
    %c0_i32 = arith.constant 0 : i32
    %c0_i32_0 = arith.constant 0 : i32
    %c0_i32_1 = arith.constant 0 : i32
    return %c0_i32, %c0_i32_0 : i32, i32
  }
  func.func @transform_6(%arg0: i32) -> (i32, i32) {
    %c0_i32 = arith.constant 0 : i32
    %c0_i32_0 = arith.constant 0 : i32
    %c0_i32_1 = arith.constant 0 : i32
    return %c0_i32, %c0_i32_0 : i32, i32
  }
  func.func @transform_7(%arg0: i32) -> (i32, i32) {
    %c0_i32 = arith.constant 0 : i32
    %c0_i32_0 = arith.constant 0 : i32
    return %arg0, %c0_i32 : i32, i32
  }
}

</mosaic_0001>

<llo_original>
// kernel: tpu_custom_call.1
$region0: #{tpu_custom_call.1}
  #allocation0 [shape = 'u32[]', space=smem, size = 0x4, offset = 0x4, fixed_abs, tag = 'smem constant byte address 0x4 - core index']
  #allocation1 [shape = 'u32[72,128]{1,0:T(1,128)}', space=vmem, size = 0x9000, scoped, tag = 'internal scratch']
  %s0 = inlined_call_operand.hbm [shape: f32[500,128], index: 0, kind: input, shape index: {}]
  %s1 = inlined_call_operand.vmem [shape: f32[128,64], index: 1, kind: input, shape index: {}]
  %s2 = inlined_call_operand.vmem [shape: f32[1,64], index: 2, kind: input, shape index: {}]
  %s3 = inlined_call_operand.vmem [shape: f32[64,64], index: 3, kind: input, shape index: {}]
  %s4 = inlined_call_operand.vmem [shape: f32[1,64], index: 4, kind: input, shape index: {}]
  %s5 = inlined_call_operand.vmem [shape: f32[64,2], index: 5, kind: input, shape index: {}]
  %s6 = inlined_call_operand.vmem [shape: f32[1,2], index: 6, kind: input, shape index: {}]
  %s7 = inlined_call_operand.vmem [shape: f32[500,2], index: 7, kind: output, shape index: {}]
  %s8 = sld [smem:[#allocation0]]
  $region113: #{tpu_custom_call.1} parent=0
    _
  %s10 = ssub.s32 1, %s8
  %s11 = scalar_select 0, %s10, %s8
  $region1: #{tpu_custom_call.1} parent=0
    #allocation2 [shape = 'u8[122880]{0}', space=vmem, size = 0x1e000, scoped, tag = 'input window, operand 0']
    #allocation3 [shape = 's32[2]{0}', space=sflag, size = 0x8, scoped, tag = 'scoped memory for tpu_custom_call.1']
    #allocation4 [shape = 'u8[122880]{0}', space=vmem, size = 0x1e000, scoped, tag = 'output window, operand 0']
    %12 = vsyncpa [#allocation3], 0
    %s13 = scalar_lea.sflag [#allocation3], 1
    %14 = vsyncpa %s13, 0
    loop: start=0, step=1, limit=7
    $region2: #{tpu_custom_call.1} parent=1 // loop_pre_header
      _
    $region3: #{tpu_custom_call.1} parent=1 // loop_header
      %s16 = sphi 0, %s20
      %p17 = scmp.ge.s32.totalorder %s16, 7
      %s26 = sphi 0, %s28
      %s29 = sphi 0, %s26
      %s30 = sphi 0, %s29
      %s46 = sphi 0, %s30
      %s50 = sphi 0, %s50
      %s52 = sphi 0, %s50
      %s53 = sphi 0, %s52
      %s67 = sphi 0, %s53
      %s71 = sphi 0, %s71
      %s73 = sphi 0, %s71
      %s74 = sphi 0, %s73
      %s88 = sphi 0, %s74
      %s92 = sphi 0, %s92
      %s94 = sphi 0, %s92
      %s95 = sphi 0, %s94
      %s109 = sphi 0, %s95
      %s113 = sphi 0, %s113
      %s115 = sphi 0, %s113
      %s116 = sphi 0, %s115
      %s130 = sphi 0, %s116
      %s134 = sphi 0, %s134
      %s136 = sphi 0, %s134
      %s137 = sphi 0, %s136
      %s151 = sphi 0, %s137
      %s155 = sphi 0, %s155
      %s157 = sphi 0, %s155
      %s158 = sphi 0, %s157
      %s172 = sphi 0, %s158
      %s178 = sphi 0, %s180
      %s181 = sphi 0, %s178
      %s182 = sphi 0, %s181
      %s198 = sphi 0, %s182
    $region4: #{tpu_custom_call.1} parent=1 // loop_header_branch
      %19 = sbr.rel (%p17) target = $region8
    $region5: #{tpu_custom_call.1} parent=1 // loop_body
      %s21 = ssub.s32 %s16, 1
      %s22 = ssub.s32 %s16, 2
      %s23 = sadd.s32 %s16, 1
      %s24 = ssub.s32 %s16, %s23
      %p25 = scmp.eq.s32.totalorder %s24, 0
      %s27 = sadd.s32 %s26, 1
      %s28 = scalar_select %p25, %s26, %s27
      %p31 = pneg %p25
      %p32 = scmp.eq.s32.totalorder %s16, 4
      %p33 = por %p31, %p32
      %p34 = scmp.ne.s32.totalorder %s26, %s29
      %p35 = scmp.eq.s32.totalorder %s16, 0
      %p36 = por %p34, %p35
      %p37 = scmp.ne.s32.totalorder %s26, %s29
      %p38 = scmp.eq.s32.totalorder %s21, 4
      %p39 = por %p37, %p38
      %p40 = scmp.ne.s32.totalorder %s29, %s30
      %p41 = scmp.eq.s32.totalorder %s21, 0
      %p42 = por %p40, %p41
      %p43 = scmp.ne.s32.totalorder %s29, %s30
      %p44 = scmp.eq.s32.totalorder %s22, 4
      %p45 = por %p43, %p44
      %p47 = scmp.ne.s32.totalorder %s30, %s46
      %p48 = scmp.eq.s32.totalorder %s22, 0
      %p49 = por %p47, %p48
      %s51 = sadd.s32 %s50, 1
      %p54 = scmp.eq.s32.totalorder %s16, 4
      %p55 = scmp.ne.s32.totalorder %s50, %s52
      %p56 = scmp.eq.s32.totalorder %s16, 0
      %p57 = por %p55, %p56
      %p58 = scmp.ne.s32.totalorder %s50, %s52
      %p59 = scmp.eq.s32.totalorder %s21, 4
      %p60 = por %p58, %p59
      %p61 = scmp.ne.s32.totalorder %s52, %s53
      %p62 = scmp.eq.s32.totalorder %s21, 0
      %p63 = por %p61, %p62
      %p64 = scmp.ne.s32.totalorder %s52, %s53
      %p65 = scmp.eq.s32.totalorder %s22, 4
      %p66 = por %p64, %p65
      %p68 = scmp.ne.s32.totalorder %s53, %s67
      %p69 = scmp.eq.s32.totalorder %s22, 0
      %p70 = por %p68, %p69
      %s72 = sadd.s32 %s71, 1
      %p75 = scmp.eq.s32.totalorder %s16, 4
      %p76 = scmp.ne.s32.totalorder %s71, %s73
      %p77 = scmp.eq.s32.totalorder %s16, 0
      %p78 = por %p76, %p77
      %p79 = scmp.ne.s32.totalorder %s71, %s73
      %p80 = scmp.eq.s32.totalorder %s21, 4
      %p81 = por %p79, %p80
      %p82 = scmp.ne.s32.totalorder %s73, %s74
      %p83 = scmp.eq.s32.totalorder %s21, 0
      %p84 = por %p82, %p83
      %p85 = scmp.ne.s32.totalorder %s73, %s74
      %p86 = scmp.eq.s32.totalorder %s22, 4
      %p87 = por %p85, %p86
      %p89 = scmp.ne.s32.totalorder %s74, %s88
      %p90 = scmp.eq.s32.totalorder %s22, 0
      %p91 = por %p89, %p90
      %s93 = sadd.s32 %s92, 1
      %p96 = scmp.eq.s32.totalorder %s16, 4
      %p97 = scmp.ne.s32.totalorder %s92, %s94
      %p98 = scmp.eq.s32.totalorder %s16, 0
      %p99 = por %p97, %p98
      %p100 = scmp.ne.s32.totalorder %s92, %s94
      %p101 = scmp.eq.s32.totalorder %s21, 4
      %p102 = por %p100, %p101
      %p103 = scmp.ne.s32.totalorder %s94, %s95
      %p104 = scmp.eq.s32.totalorder %s21, 0
      %p105 = por %p103, %p104
      %p106 = scmp.ne.s32.totalorder %s94, %s95
      %p107 = scmp.eq.s32.totalorder %s22, 4
      %p108 = por %p106, %p107
      %p110 = scmp.ne.s32.totalorder %s95, %s109
      %p111 = scmp.eq.s32.totalorder %s22, 0
      %p112 = por %p110, %p111
      %s114 = sadd.s32 %s113, 1
      %p117 = scmp.eq.s32.totalorder %s16, 4
      %p118 = scmp.ne.s32.totalorder %s113, %s115
      %p119 = scmp.eq.s32.totalorder %s16, 0
      %p120 = por %p118, %p119
      %p121 = scmp.ne.s32.totalorder %s113, %s115
      %p122 = scmp.eq.s32.totalorder %s21, 4
      %p123 = por %p121, %p122
      %p124 = scmp.ne.s32.totalorder %s115, %s116
      %p125 = scmp.eq.s32.totalorder %s21, 0
      %p126 = por %p124, %p125
      %p127 = scmp.ne.s32.totalorder %s115, %s116
      %p128 = scmp.eq.s32.totalorder %s22, 4
      %p129 = por %p127, %p128
      %p131 = scmp.ne.s32.totalorder %s116, %s130
      %p132 = scmp.eq.s32.totalorder %s22, 0
      %p133 = por %p131, %p132
      %s135 = sadd.s32 %s134, 1
      %p138 = scmp.eq.s32.totalorder %s16, 4
      %p139 = scmp.ne.s32.totalorder %s134, %s136
      %p140 = scmp.eq.s32.totalorder %s16, 0
      %p141 = por %p139, %p140
      %p142 = scmp.ne.s32.totalorder %s134, %s136
      %p143 = scmp.eq.s32.totalorder %s21, 4
      %p144 = por %p142, %p143
      %p145 = scmp.ne.s32.totalorder %s136, %s137
      %p146 = scmp.eq.s32.totalorder %s21, 0
      %p147 = por %p145, %p146
      %p148 = scmp.ne.s32.totalorder %s136, %s137
      %p149 = scmp.eq.s32.totalorder %s22, 4
      %p150 = por %p148, %p149
      %p152 = scmp.ne.s32.totalorder %s137, %s151
      %p153 = scmp.eq.s32.totalorder %s22, 0
      %p154 = por %p152, %p153
      %s156 = sadd.s32 %s155, 1
      %p159 = scmp.eq.s32.totalorder %s16, 4
      %p160 = scmp.ne.s32.totalorder %s155, %s157
      %p161 = scmp.eq.s32.totalorder %s16, 0
      %p162 = por %p160, %p161
      %p163 = scmp.ne.s32.totalorder %s155, %s157
      %p164 = scmp.eq.s32.totalorder %s21, 4
      %p165 = por %p163, %p164
      %p166 = scmp.ne.s32.totalorder %s157, %s158
      %p167 = scmp.eq.s32.totalorder %s21, 0
      %p168 = por %p166, %p167
      %p169 = scmp.ne.s32.totalorder %s157, %s158
      %p170 = scmp.eq.s32.totalorder %s22, 4
      %p171 = por %p169, %p170
      %p173 = scmp.ne.s32.totalorder %s158, %s172
      %p174 = scmp.eq.s32.totalorder %s22, 0
      %p175 = por %p173, %p174
      %s176 = ssub.s32 %s16, %s23
      %p177 = scmp.eq.s32.totalorder %s176, 0
      %s179 = sadd.s32 %s178, 1
      %s180 = scalar_select %p177, %s178, %s179
      %p183 = pneg %p177
      %p184 = scmp.eq.s32.totalorder %s16, 4
      %p185 = por %p183, %p184
      %p186 = scmp.ne.s32.totalorder %s178, %s181
      %p187 = scmp.eq.s32.totalorder %s16, 0
      %p188 = por %p186, %p187
      %p189 = scmp.ne.s32.totalorder %s178, %s181
      %p190 = scmp.eq.s32.totalorder %s21, 4
      %p191 = por %p189, %p190
      %p192 = scmp.ne.s32.totalorder %s181, %s182
      %p193 = scmp.eq.s32.totalorder %s21, 0
      %p194 = por %p192, %p193
      %p195 = scmp.ne.s32.totalorder %s181, %s182
      %p196 = scmp.eq.s32.totalorder %s22, 4
      %p197 = por %p195, %p196
      %p199 = scmp.ne.s32.totalorder %s182, %s198
      %p200 = scmp.eq.s32.totalorder %s22, 0
      %p201 = por %p199, %p200
      %p202 = scmp.le.s32.totalorder 1, %s16
      %p203 = scmp.lt.s32.totalorder %s16, 6
      %p204 = pnand %p202, %p203
      %p205 = pneg %p204
      // Predicated region
      $region9: #{tpu_custom_call.1} parent=5 // pred_check
        _
      $region10: #{tpu_custom_call.1} parent=5 // pred_check_branch
        %207 = sbr.rel (%p204) target = $region12
      $region11: #{tpu_custom_call.1} parent=5 // pred_region
        %s208 = ssub.s32 %s16, 1
        // Predicated region
        $region13: #{tpu_custom_call.1} parent=11 // pred_check
          %p209 = pneg %p63
        $region14: #{tpu_custom_call.1} parent=11 // pred_check_branch
          %211 = sbr.rel (%p209) target = $region16
        $region15: #{tpu_custom_call.1} parent=11 // pred_region
          _
        $region16: #{tpu_custom_call.1} parent=11 // pred_fallthru
          _
        // Predicated region
        $region17: #{tpu_custom_call.1} parent=11 // pred_check
          %p212 = pneg %p84
        $region18: #{tpu_custom_call.1} parent=11 // pred_check_branch
          %214 = sbr.rel (%p212) target = $region20
        $region19: #{tpu_custom_call.1} parent=11 // pred_region
          _
        $region20: #{tpu_custom_call.1} parent=11 // pred_fallthru
          _
        // Predicated region
        $region21: #{tpu_custom_call.1} parent=11 // pred_check
          %p215 = pneg %p105
        $region22: #{tpu_custom_call.1} parent=11 // pred_check_branch
          %217 = sbr.rel (%p215) target = $region24
        $region23: #{tpu_custom_call.1} parent=11 // pred_region
          _
        $region24: #{tpu_custom_call.1} parent=11 // pred_fallthru
          _
        // Predicated region
        $region25: #{tpu_custom_call.1} parent=11 // pred_check
          %p218 = pneg %p126
        $region26: #{tpu_custom_call.1} parent=11 // pred_check_branch
          %220 = sbr.rel (%p218) target = $region28
        $region27: #{tpu_custom_call.1} parent=11 // pred_region
          _
        $region28: #{tpu_custom_call.1} parent=11 // pred_fallthru
          _
        // Predicated region
        $region29: #{tpu_custom_call.1} parent=11 // pred_check
          %p221 = pneg %p147
        $region30: #{tpu_custom_call.1} parent=11 // pred_check_branch
          %223 = sbr.rel (%p221) target = $region32
        $region31: #{tpu_custom_call.1} parent=11 // pred_region
          _
        $region32: #{tpu_custom_call.1} parent=11 // pred_fallthru
          _
        // Predicated region
        $region33: #{tpu_custom_call.1} parent=11 // pred_check
          %p224 = pneg %p168
        $region34: #{tpu_custom_call.1} parent=11 // pred_check_branch
          %226 = sbr.rel (%p224) target = $region36
        $region35: #{tpu_custom_call.1} parent=11 // pred_region
          _
        $region36: #{tpu_custom_call.1} parent=11 // pred_fallthru
          _
      $region12: #{tpu_custom_call.1} parent=5 // pred_fallthru
        _
      %p227 = scmp.lt.s32.totalorder %s16, 5
      // Predicated region
      $region37: #{tpu_custom_call.1} parent=5 // pred_check
        %p228 = pneg %p227
      $region38: #{tpu_custom_call.1} parent=5 // pred_check_branch
        %230 = sbr.rel (%p228) target = $region40
      $region39: #{tpu_custom_call.1} parent=5 // pred_region
        // Predicated region
        $region41: #{tpu_custom_call.1} parent=39 // pred_check
          %p231 = pneg %p36
        $region42: #{tpu_custom_call.1} parent=39 // pred_check_branch
          %233 = sbr.rel (%p231) target = $region44
        $region43: #{tpu_custom_call.1} parent=39 // pred_region
          %s234 = sand.u32 %s26, 1
          %s235 = scalar_lea.sflag [#allocation3], %s234
          %s236 = sand.u32 %s26, 1
          %s237 = smul.addr %s236, 120
          %s238 = scalar_lea.vmem [#allocation2], %s237
          %s239 = smul.u32 15, %s16
          %s240 = ssub.s32 63, %s239
          %p241 = scmp.lt.s32.totalorder %s240, 15
          %s242 = scalar_select %p241, %s240, 15
          %s243 = smul.u32 8, %s242
          %s244 = ssub.s32 120, %s243
          %s245 = sshll.u32 %s244, 4
          %246 = vsyncadd %s235, %s245
          %p247 = scmp.ne.s32.totalorder 0, %s243
          %s248 = smul.addr %s239, 8
          %s249 = scalar_lea.hbm %s0, %s248
          %s250 = smul.u32 8, %s242
          %s251 = sshll.u32 %s249, 4
          %s252 = int_to_ptr.hbm [resolvable:$true] %s251
          %s253 = sshll.u32 %s238, 4
          %s254 = int_to_ptr.vmem [resolvable:$true] %s253
          %s255 = sshll.u32 %s250, 4
          %259 = dma.hbm_to_vmem [thread:$0]  (%p247), %s252, %s255, %s254, %s235, 128, 128, 8
        $region44: #{tpu_custom_call.1} parent=39 // pred_fallthru
          _
      $region40: #{tpu_custom_call.1} parent=5 // pred_fallthru
        _
      %p260 = scmp.le.s32.totalorder 1, %s16
      %p261 = scmp.lt.s32.totalorder %s16, 6
      %p262 = pnand %p260, %p261
      %p263 = pneg %p262
      // Predicated region
      $region45: #{tpu_custom_call.1} parent=5 // pred_check
        _
      $region46: #{tpu_custom_call.1} parent=5 // pred_check_branch
        %265 = sbr.rel (%p262) target = $region48
      $region47: #{tpu_custom_call.1} parent=5 // pred_region
        %s266 = ssub.s32 %s16, 1
        %s267 = sand.u32 %s29, 1
        %s268 = scalar_lea.sflag [#allocation3], %s267
        %s269 = sand.u32 %s29, 1
        %s270 = smul.addr %s269, 120
        %s271 = scalar_lea.vmem [#allocation2], %s270
        // Predicated region
        $region49: #{tpu_custom_call.1} parent=47 // pred_check
          %p272 = pneg %p42
        $region50: #{tpu_custom_call.1} parent=47 // pred_check_branch
          %274 = sbr.rel (%p272) target = $region52
        $region51: #{tpu_custom_call.1} parent=47 // pred_region
          %276 = dma.done %s268, 1920
        $region52: #{tpu_custom_call.1} parent=47 // pred_fallthru
          _
        %s277 = sand.u32 %s29, 1
        %s278 = scalar_lea.sflag [#allocation3], %s277
        %s279 = sand.u32 %s29, 1
        %s280 = smul.addr %s279, 120
        %s281 = scalar_lea.vmem [#allocation2], %s280
        %p282 = pneg %p42
        %p283 = pneg %p39
        %p284 = pneg %p63
        %p285 = pneg %p60
        %p286 = pneg %p84
        %p287 = pneg %p81
        %p288 = pneg %p105
        %p289 = pneg %p102
        %p290 = pneg %p126
        %p291 = pneg %p123
        %p292 = pneg %p147
        %p293 = pneg %p144
        %p294 = pneg %p168
        %p295 = pneg %p165
        %p296 = pneg %p194
        %p297 = pneg %p191
        %s298 = sand.u32 %s181, 1
        %s299 = sand.u32 %s181, 1
        %s300 = smul.addr %s299, 120
        %s301 = scalar_lea.vmem [#allocation4], %s300
        %s302 = smul.u32 15, %s21
        %s303 = ssub.s32 63, %s302
        %p304 = scmp.lt.s32.totalorder %s303, 15
        %s305 = scalar_select %p304, %s303, 15
        %s306 = smul.u32 8, %s305
        %s307 = smul.u32 15, %s21
        %s308 = ssub.s32 63, %s307
        %p309 = scmp.lt.s32.totalorder %s308, 15
        %s310 = scalar_select %p309, %s308, 15
        %s311 = smul.u32 8, %s310
        %v312 = vld [vmem:[%s271] sm:$0xff]
        %v313 = vld [vmem:[%s271 + $0x8] sm:$0xff]
        %v314 = vld [vmem:[%s271 + $0x10] sm:$0xff]
        %v315 = vld [vmem:[%s271 + $0x18] sm:$0xff]
        %v316 = vld [vmem:[%s271 + $0x20] sm:$0xff]
        %v317 = vld [vmem:[%s271 + $0x28] sm:$0xff]
        %v318 = vld [vmem:[%s271 + $0x30] sm:$0xff]
        %v319 = vld [vmem:[%s271 + $0x38] sm:$0xff]
        %v320 = vld [vmem:[%s271 + $0x40] sm:$0xff]
        %v321 = vld [vmem:[%s271 + $0x48] sm:$0xff]
        %v322 = vld [vmem:[%s271 + $0x50] sm:$0xff]
        %v323 = vld [vmem:[%s271 + $0x58] sm:$0xff]
        %v324 = vld [vmem:[%s271 + $0x60] sm:$0xff]
        %v325 = vld [vmem:[%s271 + $0x68] sm:$0xff]
        %v326 = vld [vmem:[%s271 + $0x70] sm:$0xff]
        %v327 = vld [vmem:[%s1] sm:$0xff]
        %v328 = vld [vmem:[%s1 + $0x8] sm:$0xff]
        %v329 = vld [vmem:[%s1 + $0x10] sm:$0xff]
        %v330 = vld [vmem:[%s1 + $0x18] sm:$0xff]
        %v331 = vld [vmem:[%s1 + $0x20] sm:$0xff]
        %v332 = vld [vmem:[%s1 + $0x28] sm:$0xff]
        %v333 = vld [vmem:[%s1 + $0x30] sm:$0xff]
        %v334 = vld [vmem:[%s1 + $0x38] sm:$0xff]
        %v335 = vld [vmem:[%s1 + $0x40] sm:$0xff]
        %v336 = vld [vmem:[%s1 + $0x48] sm:$0xff]
        %v337 = vld [vmem:[%s1 + $0x50] sm:$0xff]
        %v338 = vld [vmem:[%s1 + $0x58] sm:$0xff]
        %v339 = vld [vmem:[%s1 + $0x60] sm:$0xff]
        %v340 = vld [vmem:[%s1 + $0x68] sm:$0xff]
        %v341 = vld [vmem:[%s1 + $0x70] sm:$0xff]
        %v342 = vld [vmem:[%s1 + $0x78] sm:$0xff]
        %v343 = vld [vmem:[%s2] sm:$0x1]
        %v345 = vperm.slane %v343, 0
        %347 = vmatpush.msra.mxu0 %v342
        %348 = vmatpush.msra.mxu0 %v341
        %349 = vmatpush.msra.mxu0 %v340
        %350 = vmatpush.msra.mxu0 %v339
        %351 = vmatpush.msra.mxu0 %v338
        %352 = vmatpush.msra.mxu0 %v337
        %353 = vmatpush.msra.mxu0 %v336
        %354 = vmatpush.msra.mxu0 %v335
        %355 = vmatpush.msra.mxu0 %v334
        %356 = vmatpush.msra.mxu0 %v333
        %357 = vmatpush.msra.mxu0 %v332
        %358 = vmatpush.msra.mxu0 %v331
        %359 = vmatpush.msra.mxu0 %v330
        %360 = vmatpush.msra.mxu0 %v329
        %361 = vmatpush.msra.mxu0 %v328
        %362 = vmatpush.msra.mxu0 %v327
        %363 = vmatmul.f32.gmra.mxu0 %v312
        %v364 = vpop.f32.mrf.mxu0
        %v365 = vadd.f32 %v345, %v364
        %366 = vmatmul.f32.gmra.mxu0 %v313
        %v367 = vpop.f32.mrf.mxu0
        %v368 = vadd.f32 %v345, %v367
        %369 = vmatmul.f32.gmra.mxu0 %v314
        %v370 = vpop.f32.mrf.mxu0
        %v371 = vadd.f32 %v345, %v370
        %372 = vmatmul.f32.gmra.mxu0 %v315
        %v373 = vpop.f32.mrf.mxu0
        %v374 = vadd.f32 %v345, %v373
        %375 = vmatmul.f32.gmra.mxu0 %v316
        %v376 = vpop.f32.mrf.mxu0
        %v377 = vadd.f32 %v345, %v376
        %378 = vmatmul.f32.gmra.mxu0 %v317
        %v379 = vpop.f32.mrf.mxu0
        %v380 = vadd.f32 %v345, %v379
        %381 = vmatmul.f32.gmra.mxu0 %v318
        %v382 = vpop.f32.mrf.mxu0
        %v383 = vadd.f32 %v345, %v382
        %384 = vmatmul.f32.gmra.mxu0 %v319
        %v385 = vpop.f32.mrf.mxu0
        %v386 = vadd.f32 %v345, %v385
        %387 = vmatmul.f32.gmra.mxu0 %v320
        %v388 = vpop.f32.mrf.mxu0
        %v389 = vadd.f32 %v345, %v388
        %390 = vmatmul.f32.gmra.mxu0 %v321
        %v391 = vpop.f32.mrf.mxu0
        %v392 = vadd.f32 %v345, %v391
        %393 = vmatmul.f32.gmra.mxu0 %v322
        %v394 = vpop.f32.mrf.mxu0
        %v395 = vadd.f32 %v345, %v394
        %396 = vmatmul.f32.gmra.mxu0 %v323
        %v397 = vpop.f32.mrf.mxu0
        %v398 = vadd.f32 %v345, %v397
        %399 = vmatmul.f32.gmra.mxu0 %v324
        %v400 = vpop.f32.mrf.mxu0
        %v401 = vadd.f32 %v345, %v400
        %402 = vmatmul.f32.gmra.mxu0 %v325
        %v403 = vpop.f32.mrf.mxu0
        %v404 = vadd.f32 %v345, %v403
        %405 = vmatmul.f32.gmra.mxu0 %v326
        %v406 = vpop.f32.mrf.mxu0
        %v407 = vadd.f32 %v345, %v406
        %408 = vdwg.mxu0
        %v409 = vmax.f32 %v365, 0.0
        %v410 = vmax.f32 %v368, 0.0
        %v411 = vmax.f32 %v371, 0.0
        %v412 = vmax.f32 %v374, 0.0
        %v413 = vmax.f32 %v377, 0.0
        %v414 = vmax.f32 %v380, 0.0
        %v415 = vmax.f32 %v383, 0.0
        %v416 = vmax.f32 %v386, 0.0
        %v417 = vmax.f32 %v389, 0.0
        %v418 = vmax.f32 %v392, 0.0
        %v419 = vmax.f32 %v395, 0.0
        %v420 = vmax.f32 %v398, 0.0
        %v421 = vmax.f32 %v401, 0.0
        %v422 = vmax.f32 %v404, 0.0
        %v423 = vmax.f32 %v407, 0.0
        %v424 = vld [vmem:[%s3] sm:$0xff]
        %v425 = vld [vmem:[%s3 + $0x8] sm:$0xff]
        %v426 = vld [vmem:[%s3 + $0x10] sm:$0xff]
        %v427 = vld [vmem:[%s3 + $0x18] sm:$0xff]
        %v428 = vld [vmem:[%s3 + $0x20] sm:$0xff]
        %v429 = vld [vmem:[%s3 + $0x28] sm:$0xff]
        %v430 = vld [vmem:[%s3 + $0x30] sm:$0xff]
        %v431 = vld [vmem:[%s3 + $0x38] sm:$0xff]
        %v432 = vld [vmem:[%s4] sm:$0x1]
        %v434 = vperm.slane %v432, 0
        %vm436 = vcmask 523264
        %v438 = vsel %vm436, %v409, 0
        %v441 = vsel %vm436, %v410, 0
        %v444 = vsel %vm436, %v411, 0
        %v447 = vsel %vm436, %v412, 0
        %v450 = vsel %vm436, %v413, 0
        %v453 = vsel %vm436, %v414, 0
        %v456 = vsel %vm436, %v415, 0
        %v459 = vsel %vm436, %v416, 0
        %v462 = vsel %vm436, %v417, 0
        %v465 = vsel %vm436, %v418, 0
        %v468 = vsel %vm436, %v419, 0
        %v471 = vsel %vm436, %v420, 0
        %v474 = vsel %vm436, %v421, 0
        %v477 = vsel %vm436, %v422, 0
        %v480 = vsel %vm436, %v423, 0
        %482 = vmatpush.msra.mxu0 0.0
        %483 = vmatpush.msra.mxu0 0.0
        %484 = vmatpush.msra.mxu0 0.0
        %485 = vmatpush.msra.mxu0 0.0
        %486 = vmatpush.msra.mxu0 0.0
        %487 = vmatpush.msra.mxu0 0.0
        %488 = vmatpush.msra.mxu0 0.0
        %489 = vmatpush.msra.mxu0 0.0
        %490 = vmatpush.msra.mxu0 %v431
        %491 = vmatpush.msra.mxu0 %v430
        %492 = vmatpush.msra.mxu0 %v429
        %493 = vmatpush.msra.mxu0 %v428
        %494 = vmatpush.msra.mxu0 %v427
        %495 = vmatpush.msra.mxu0 %v426
        %496 = vmatpush.msra.mxu0 %v425
        %497 = vmatpush.msra.mxu0 %v424
        %498 = vmatmul.f32.gmra.mxu0 %v438
        %v499 = vpop.f32.mrf.mxu0
        %v500 = vadd.f32 %v434, %v499
        %501 = vmatmul.f32.gmra.mxu0 %v441
        %v502 = vpop.f32.mrf.mxu0
        %v503 = vadd.f32 %v434, %v502
        %504 = vmatmul.f32.gmra.mxu0 %v444
        %v505 = vpop.f32.mrf.mxu0
        %v506 = vadd.f32 %v434, %v505
        %507 = vmatmul.f32.gmra.mxu0 %v447
        %v508 = vpop.f32.mrf.mxu0
        %v509 = vadd.f32 %v434, %v508
        %510 = vmatmul.f32.gmra.mxu0 %v450
        %v511 = vpop.f32.mrf.mxu0
        %v512 = vadd.f32 %v434, %v511
        %513 = vmatmul.f32.gmra.mxu0 %v453
        %v514 = vpop.f32.mrf.mxu0
        %v515 = vadd.f32 %v434, %v514
        %516 = vmatmul.f32.gmra.mxu0 %v456
        %v517 = vpop.f32.mrf.mxu0
        %v518 = vadd.f32 %v434, %v517
        %519 = vmatmul.f32.gmra.mxu0 %v459
        %v520 = vpop.f32.mrf.mxu0
        %v521 = vadd.f32 %v434, %v520
        %522 = vmatmul.f32.gmra.mxu0 %v462
        %v523 = vpop.f32.mrf.mxu0
        %v524 = vadd.f32 %v434, %v523
        %525 = vmatmul.f32.gmra.mxu0 %v465
        %v526 = vpop.f32.mrf.mxu0
        %v527 = vadd.f32 %v434, %v526
        %528 = vmatmul.f32.gmra.mxu0 %v468
        %v529 = vpop.f32.mrf.mxu0
        %v530 = vadd.f32 %v434, %v529
        %531 = vmatmul.f32.gmra.mxu0 %v471
        %v532 = vpop.f32.mrf.mxu0
        %v533 = vadd.f32 %v434, %v532
        %534 = vmatmul.f32.gmra.mxu0 %v474
        %v535 = vpop.f32.mrf.mxu0
        %v536 = vadd.f32 %v434, %v535
        %537 = vmatmul.f32.gmra.mxu0 %v477
        %v538 = vpop.f32.mrf.mxu0
        %v539 = vadd.f32 %v434, %v538
        %540 = vmatmul.f32.gmra.mxu0 %v480
        %v541 = vpop.f32.mrf.mxu0
        %v542 = vadd.f32 %v434, %v541
        %543 = vdwg.mxu0
        %v544 = vmax.f32 %v500, 0.0
        %v545 = vmax.f32 %v503, 0.0
        %v546 = vmax.f32 %v506, 0.0
        %v547 = vmax.f32 %v509, 0.0
        %v548 = vmax.f32 %v512, 0.0
        %v549 = vmax.f32 %v515, 0.0
        %v550 = vmax.f32 %v518, 0.0
        %v551 = vmax.f32 %v521, 0.0
        %v552 = vmax.f32 %v524, 0.0
        %v553 = vmax.f32 %v527, 0.0
        %v554 = vmax.f32 %v530, 0.0
        %v555 = vmax.f32 %v533, 0.0
        %v556 = vmax.f32 %v536, 0.0
        %v557 = vmax.f32 %v539, 0.0
        %v558 = vmax.f32 %v542, 0.0
        %v559 = vld [vmem:[%s5] sm:$0xff]
        %v560 = vld [vmem:[%s5 + $0x8] sm:$0xff]
        %v561 = vld [vmem:[%s5 + $0x10] sm:$0xff]
        %v562 = vld [vmem:[%s5 + $0x18] sm:$0xff]
        %v563 = vld [vmem:[%s5 + $0x20] sm:$0xff]
        %v564 = vld [vmem:[%s5 + $0x28] sm:$0xff]
        %v565 = vld [vmem:[%s5 + $0x30] sm:$0xff]
        %v566 = vld [vmem:[%s5 + $0x38] sm:$0xff]
        %v567 = vld [vmem:[%s6] sm:$0x1]
        %v569 = vperm.slane %v567, 0
        %v572 = vsel %vm436, %v544, 0
        %v575 = vsel %vm436, %v545, 0
        %v578 = vsel %vm436, %v546, 0
        %v581 = vsel %vm436, %v547, 0
        %v584 = vsel %vm436, %v548, 0
        %v587 = vsel %vm436, %v549, 0
        %v590 = vsel %vm436, %v550, 0
        %v593 = vsel %vm436, %v551, 0
        %v596 = vsel %vm436, %v552, 0
        %v599 = vsel %vm436, %v553, 0
        %v602 = vsel %vm436, %v554, 0
        %v605 = vsel %vm436, %v555, 0
        %v608 = vsel %vm436, %v556, 0
        %v611 = vsel %vm436, %v557, 0
        %v614 = vsel %vm436, %v558, 0
        %616 = vmatpush.msra.mxu0 0.0
        %617 = vmatpush.msra.mxu0 0.0
        %618 = vmatpush.msra.mxu0 0.0
        %619 = vmatpush.msra.mxu0 0.0
        %620 = vmatpush.msra.mxu0 0.0
        %621 = vmatpush.msra.mxu0 0.0
        %622 = vmatpush.msra.mxu0 0.0
        %623 = vmatpush.msra.mxu0 0.0
        %624 = vmatpush.msra.mxu0 %v566
        %625 = vmatpush.msra.mxu0 %v565
        %626 = vmatpush.msra.mxu0 %v564
        %627 = vmatpush.msra.mxu0 %v563
        %628 = vmatpush.msra.mxu0 %v562
        %629 = vmatpush.msra.mxu0 %v561
        %630 = vmatpush.msra.mxu0 %v560
        %631 = vmatpush.msra.mxu0 %v559
        %632 = vmatmul.f32.gmra.mxu0 %v572
        %v633 = vpop.f32.mrf.mxu0
        %v634 = vadd.f32 %v569, %v633
        %635 = vmatmul.f32.gmra.mxu0 %v575
        %v636 = vpop.f32.mrf.mxu0
        %v637 = vadd.f32 %v569, %v636
        %638 = vmatmul.f32.gmra.mxu0 %v578
        %v639 = vpop.f32.mrf.mxu0
        %v640 = vadd.f32 %v569, %v639
        %641 = vmatmul.f32.gmra.mxu0 %v581
        %v642 = vpop.f32.mrf.mxu0
        %v643 = vadd.f32 %v569, %v642
        %644 = vmatmul.f32.gmra.mxu0 %v584
        %v645 = vpop.f32.mrf.mxu0
        %v646 = vadd.f32 %v569, %v645
        %647 = vmatmul.f32.gmra.mxu0 %v587
        %v648 = vpop.f32.mrf.mxu0
        %v649 = vadd.f32 %v569, %v648
        %650 = vmatmul.f32.gmra.mxu0 %v590
        %v651 = vpop.f32.mrf.mxu0
        %v652 = vadd.f32 %v569, %v651
        %653 = vmatmul.f32.gmra.mxu0 %v593
        %v654 = vpop.f32.mrf.mxu0
        %v655 = vadd.f32 %v569, %v654
        %656 = vmatmul.f32.gmra.mxu0 %v596
        %v657 = vpop.f32.mrf.mxu0
        %v658 = vadd.f32 %v569, %v657
        %659 = vmatmul.f32.gmra.mxu0 %v599
        %v660 = vpop.f32.mrf.mxu0
        %v661 = vadd.f32 %v569, %v660
        %662 = vmatmul.f32.gmra.mxu0 %v602
        %v663 = vpop.f32.mrf.mxu0
        %v664 = vadd.f32 %v569, %v663
        %665 = vmatmul.f32.gmra.mxu0 %v605
        %v666 = vpop.f32.mrf.mxu0
        %v667 = vadd.f32 %v569, %v666
        %668 = vmatmul.f32.gmra.mxu0 %v608
        %v669 = vpop.f32.mrf.mxu0
        %v670 = vadd.f32 %v569, %v669
        %671 = vmatmul.f32.gmra.mxu0 %v611
        %v672 = vpop.f32.mrf.mxu0
        %v673 = vadd.f32 %v569, %v672
        %674 = vmatmul.f32.gmra.mxu0 %v614
        %v675 = vpop.f32.mrf.mxu0
        %v676 = vadd.f32 %v569, %v675
        %677 = vdwg.mxu0
        %vm678 = vcmask 15360
        %679 = vst.msk [vmem:[%s301] sm:$0xff] %vm678, %v634
        %680 = vst.msk [vmem:[%s301 + $0x8] sm:$0xff] %vm678, %v637
        %681 = vst.msk [vmem:[%s301 + $0x10] sm:$0xff] %vm678, %v640
        %682 = vst.msk [vmem:[%s301 + $0x18] sm:$0xff] %vm678, %v643
        %683 = vst.msk [vmem:[%s301 + $0x20] sm:$0xff] %vm678, %v646
        %684 = vst.msk [vmem:[%s301 + $0x28] sm:$0xff] %vm678, %v649
        %685 = vst.msk [vmem:[%s301 + $0x30] sm:$0xff] %vm678, %v652
        %686 = vst.msk [vmem:[%s301 + $0x38] sm:$0xff] %vm678, %v655
        %687 = vst.msk [vmem:[%s301 + $0x40] sm:$0xff] %vm678, %v658
        %688 = vst.msk [vmem:[%s301 + $0x48] sm:$0xff] %vm678, %v661
        %689 = vst.msk [vmem:[%s301 + $0x50] sm:$0xff] %vm678, %v664
        %690 = vst.msk [vmem:[%s301 + $0x58] sm:$0xff] %vm678, %v667
        %691 = vst.msk [vmem:[%s301 + $0x60] sm:$0xff] %vm678, %v670
        %692 = vst.msk [vmem:[%s301 + $0x68] sm:$0xff] %vm678, %v673
        %693 = vst.msk [vmem:[%s301 + $0x70] sm:$0xff] %vm678, %v676
        %s694 = sand.u32 %s181, 1
        %s695 = sand.u32 %s181, 1
        %s696 = smul.addr %s695, 120
        %s697 = scalar_lea.vmem [#allocation4], %s696
        // Predicated region
        $region53: #{tpu_custom_call.1} parent=47 // pred_check
          %p698 = pneg %p191
        $region54: #{tpu_custom_call.1} parent=47 // pred_check_branch
          %700 = sbr.rel (%p698) target = $region56
        $region55: #{tpu_custom_call.1} parent=47 // pred_region
          %s701 = smul.u32 15, %s21
          %s702 = ssub.s32 63, %s701
          %p703 = scmp.lt.s32.totalorder %s702, 15
          %s704 = scalar_select %p703, %s702, 15
          %s705 = smul.u32 8, %s704
          %p706 = scmp.ne.s32.totalorder 0, %s705
          %s707 = smul.addr %s701, 8
          %s708 = scalar_lea.vmem %s7, %s707
          // Predicated region
          $region57: #{tpu_custom_call.1} parent=55 // pred_check
            %p709 = pneg %p706
          $region58: #{tpu_custom_call.1} parent=55 // pred_check_branch
            %711 = sbr.rel (%p709) target = $region60
          $region59: #{tpu_custom_call.1} parent=55 // pred_region
            // Predicated region
            $region61: #{tpu_custom_call.1} parent=59 // pred_check
              _
            $region62: #{tpu_custom_call.1} parent=59 // pred_check_branch
              %713 = sbr.rel (0) target = $region64
            $region63: #{tpu_custom_call.1} parent=59 // pred_region
              // Predicated region
              $region83: #{tpu_custom_call.1} parent=63 // pred_check
                _
              $region84: #{tpu_custom_call.1} parent=63 // pred_check_branch
                %792 = sbr.rel (0) target = $region86
              $region85: #{tpu_custom_call.1} parent=63 // pred_region
                %s793 = sdiv.u32.pop %s704, 15
                %s794 = srem.u32.pop %s704, 15
                // While loop
                $region87: #{tpu_custom_call.1} parent=85 // loop_pre_header
                  _
                $region88: #{tpu_custom_call.1} parent=85 // loop_header
                  %s796 = sphi 0, %s798
                  %p797 = scmp.ge.s32.totalorder %s796, %s793
                  %s801 = sphi 0, %s836
                  %s802 = sphi %s697, %s839
                  %s803 = sphi %s708, %s840
                $region89: #{tpu_custom_call.1} parent=85 // loop_header_branch
                  %800 = sbr.rel (%p797) target = $region93
                $region90: #{tpu_custom_call.1} parent=85 // loop_body
                  %v804 = vld [vmem:[%s802] sm:$0xff]
                  %805 = vst [vmem:[%s803] sm:$0xff] %v804
                  %v806 = vld [vmem:[%s802 + $0x8] sm:$0xff]
                  %807 = vst [vmem:[%s803 + $0x8] sm:$0xff] %v806
                  %v808 = vld [vmem:[%s802 + $0x10] sm:$0xff]
                  %809 = vst [vmem:[%s803 + $0x10] sm:$0xff] %v808
                  %v810 = vld [vmem:[%s802 + $0x18] sm:$0xff]
                  %811 = vst [vmem:[%s803 + $0x18] sm:$0xff] %v810
                  %v812 = vld [vmem:[%s802 + $0x20] sm:$0xff]
                  %813 = vst [vmem:[%s803 + $0x20] sm:$0xff] %v812
                  %v814 = vld [vmem:[%s802 + $0x28] sm:$0xff]
                  %815 = vst [vmem:[%s803 + $0x28] sm:$0xff] %v814
                  %v816 = vld [vmem:[%s802 + $0x30] sm:$0xff]
                  %817 = vst [vmem:[%s803 + $0x30] sm:$0xff] %v816
                  %v818 = vld [vmem:[%s802 + $0x38] sm:$0xff]
                  %819 = vst [vmem:[%s803 + $0x38] sm:$0xff] %v818
                  %v820 = vld [vmem:[%s802 + $0x40] sm:$0xff]
                  %821 = vst [vmem:[%s803 + $0x40] sm:$0xff] %v820
                  %v822 = vld [vmem:[%s802 + $0x48] sm:$0xff]
                  %823 = vst [vmem:[%s803 + $0x48] sm:$0xff] %v822
                  %v824 = vld [vmem:[%s802 + $0x50] sm:$0xff]
                  %825 = vst [vmem:[%s803 + $0x50] sm:$0xff] %v824
                  %v826 = vld [vmem:[%s802 + $0x58] sm:$0xff]
                  %827 = vst [vmem:[%s803 + $0x58] sm:$0xff] %v826
                  %v828 = vld [vmem:[%s802 + $0x60] sm:$0xff]
                  %829 = vst [vmem:[%s803 + $0x60] sm:$0xff] %v828
                  %v830 = vld [vmem:[%s802 + $0x68] sm:$0xff]
                  %831 = vst [vmem:[%s803 + $0x68] sm:$0xff] %v830
                  %v832 = vld [vmem:[%s802 + $0x70] sm:$0xff]
                  %833 = vst [vmem:[%s803 + $0x70] sm:$0xff] %v832
                  %s834 = sadd.s32 1, %s801
                  %p835 = scmp.ge.s32.totalorder %s834, %s793
                  %s836 = scalar_select %p835, 0, %s834
                  %s837 = smul.u32 %s836, 120
                  %s838 = smul.u32 %s836, 120
                  %s839 = scalar_lea.vmem %s697, %s837 [#allocation4]
                  %s840 = scalar_lea.vmem %s708, %s838
                $region91: #{tpu_custom_call.1} parent=85 // loop_footer
                  %s798 = sadd.s32 %s796, 1
                $region92: #{tpu_custom_call.1} parent=85 // loop_footer_branch
                  %795 = sbr.rel target = $region88
                $region93: #{tpu_custom_call.1} parent=85 // loop_exit
                  _
                %s841 = sdiv.u32.pop %s704, 15
                %s842 = srem.u32.pop %s704, 15
                %s843 = smul.u32 %s841, 15
                %s844 = smul.u32 8, %s843
                %s845 = scalar_lea.vmem %s697, %s844 [#allocation4]
                %s846 = smul.u32 8, %s843
                %s847 = scalar_lea.vmem %s708, %s846
                // While loop
                $region94: #{tpu_custom_call.1} parent=85 // loop_pre_header
                  _
                $region95: #{tpu_custom_call.1} parent=85 // loop_header
                  %s849 = sphi 0, %s851
                  %p850 = scmp.ge.s32.totalorder %s849, %s842
                  %s854 = sphi 0, %s861
                  %s855 = sphi %s845, %s864
                  %s856 = sphi %s847, %s865
                $region96: #{tpu_custom_call.1} parent=85 // loop_header_branch
                  %853 = sbr.rel (%p850) target = $region100
                $region97: #{tpu_custom_call.1} parent=85 // loop_body
                  %v857 = vld [vmem:[%s855] sm:$0xff]
                  %858 = vst [vmem:[%s856] sm:$0xff] %v857
                  %s859 = sadd.s32 1, %s854
                  %p860 = scmp.ge.s32.totalorder %s859, %s842
                  %s861 = scalar_select %p860, 0, %s859
                  %s862 = smul.u32 %s861, 8
                  %s863 = smul.u32 %s861, 8
                  %s864 = scalar_lea.vmem %s845, %s862 [#allocation4]
                  %s865 = scalar_lea.vmem %s847, %s863
                $region98: #{tpu_custom_call.1} parent=85 // loop_footer
                  %s851 = sadd.s32 %s849, 1
                $region99: #{tpu_custom_call.1} parent=85 // loop_footer_branch
                  %848 = sbr.rel target = $region95
                $region100: #{tpu_custom_call.1} parent=85 // loop_exit
                  _
              $region86: #{tpu_custom_call.1} parent=63 // pred_fallthru
                _
              // Predicated region
              $region101: #{tpu_custom_call.1} parent=63 // pred_check
                _
              $region102: #{tpu_custom_call.1} parent=63 // pred_check_branch
                %867 = sbr.rel target = $region104
              $region103: #{tpu_custom_call.1} parent=63 // pred_region
                _
              $region104: #{tpu_custom_call.1} parent=63 // pred_fallthru
                _
            $region64: #{tpu_custom_call.1} parent=59 // pred_fallthru
              _
            // Predicated region
            $region65: #{tpu_custom_call.1} parent=59 // pred_check
              _
            $region66: #{tpu_custom_call.1} parent=59 // pred_check_branch
              %715 = sbr.rel target = $region68
            $region67: #{tpu_custom_call.1} parent=59 // pred_region
              %s717 = ssub.s32 256, 1
              %s718 = sdiv.u32.pop %s704, 15
              %s719 = srem.u32.pop %s704, 15
              // While loop
              $region69: #{tpu_custom_call.1} parent=67 // loop_pre_header
                _
              $region70: #{tpu_custom_call.1} parent=67 // loop_header
                %s721 = sphi 0, %s723
                %p722 = scmp.ge.s32.totalorder %s721, %s718
                %s726 = sphi 0, %s761
                %s727 = sphi %s697, %s764
                %s728 = sphi %s708, %s765
              $region71: #{tpu_custom_call.1} parent=67 // loop_header_branch
                %725 = sbr.rel (%p722) target = $region75
              $region72: #{tpu_custom_call.1} parent=67 // loop_body
                %v729 = vld [vmem:[%s727] sm:%s717]
                %730 = vst [vmem:[%s728] sm:%s717] %v729
                %v731 = vld [vmem:[%s727 + $0x8] sm:%s717]
                %732 = vst [vmem:[%s728 + $0x8] sm:%s717] %v731
                %v733 = vld [vmem:[%s727 + $0x10] sm:%s717]
                %734 = vst [vmem:[%s728 + $0x10] sm:%s717] %v733
                %v735 = vld [vmem:[%s727 + $0x18] sm:%s717]
                %736 = vst [vmem:[%s728 + $0x18] sm:%s717] %v735
                %v737 = vld [vmem:[%s727 + $0x20] sm:%s717]
                %738 = vst [vmem:[%s728 + $0x20] sm:%s717] %v737
                %v739 = vld [vmem:[%s727 + $0x28] sm:%s717]
                %740 = vst [vmem:[%s728 + $0x28] sm:%s717] %v739
                %v741 = vld [vmem:[%s727 + $0x30] sm:%s717]
                %742 = vst [vmem:[%s728 + $0x30] sm:%s717] %v741
                %v743 = vld [vmem:[%s727 + $0x38] sm:%s717]
                %744 = vst [vmem:[%s728 + $0x38] sm:%s717] %v743
                %v745 = vld [vmem:[%s727 + $0x40] sm:%s717]
                %746 = vst [vmem:[%s728 + $0x40] sm:%s717] %v745
                %v747 = vld [vmem:[%s727 + $0x48] sm:%s717]
                %748 = vst [vmem:[%s728 + $0x48] sm:%s717] %v747
                %v749 = vld [vmem:[%s727 + $0x50] sm:%s717]
                %750 = vst [vmem:[%s728 + $0x50] sm:%s717] %v749
                %v751 = vld [vmem:[%s727 + $0x58] sm:%s717]
                %752 = vst [vmem:[%s728 + $0x58] sm:%s717] %v751
                %v753 = vld [vmem:[%s727 + $0x60] sm:%s717]
                %754 = vst [vmem:[%s728 + $0x60] sm:%s717] %v753
                %v755 = vld [vmem:[%s727 + $0x68] sm:%s717]
                %756 = vst [vmem:[%s728 + $0x68] sm:%s717] %v755
                %v757 = vld [vmem:[%s727 + $0x70] sm:%s717]
                %758 = vst [vmem:[%s728 + $0x70] sm:%s717] %v757
                %s759 = sadd.s32 1, %s726
                %p760 = scmp.ge.s32.totalorder %s759, %s718
                %s761 = scalar_select %p760, 0, %s759
                %s762 = smul.u32 %s761, 120
                %s763 = smul.u32 %s761, 120
                %s764 = scalar_lea.vmem %s697, %s762 [#allocation4]
                %s765 = scalar_lea.vmem %s708, %s763
              $region73: #{tpu_custom_call.1} parent=67 // loop_footer
                %s723 = sadd.s32 %s721, 1
              $region74: #{tpu_custom_call.1} parent=67 // loop_footer_branch
                %720 = sbr.rel target = $region70
              $region75: #{tpu_custom_call.1} parent=67 // loop_exit
                _
              %s766 = sdiv.u32.pop %s704, 15
              %s767 = srem.u32.pop %s704, 15
              %s768 = smul.u32 %s766, 15
              %s769 = smul.u32 8, %s768
              %s770 = scalar_lea.vmem %s697, %s769 [#allocation4]
              %s771 = smul.u32 8, %s768
              %s772 = scalar_lea.vmem %s708, %s771
              // While loop
              $region76: #{tpu_custom_call.1} parent=67 // loop_pre_header
                _
              $region77: #{tpu_custom_call.1} parent=67 // loop_header
                %s774 = sphi 0, %s776
                %p775 = scmp.ge.s32.totalorder %s774, %s767
                %s779 = sphi 0, %s786
                %s780 = sphi %s770, %s789
                %s781 = sphi %s772, %s790
              $region78: #{tpu_custom_call.1} parent=67 // loop_header_branch
                %778 = sbr.rel (%p775) target = $region82
              $region79: #{tpu_custom_call.1} parent=67 // loop_body
                %v782 = vld [vmem:[%s780] sm:%s717]
                %783 = vst [vmem:[%s781] sm:%s717] %v782
                %s784 = sadd.s32 1, %s779
                %p785 = scmp.ge.s32.totalorder %s784, %s767
                %s786 = scalar_select %p785, 0, %s784
                %s787 = smul.u32 %s786, 8
                %s788 = smul.u32 %s786, 8
                %s789 = scalar_lea.vmem %s770, %s787 [#allocation4]
                %s790 = scalar_lea.vmem %s772, %s788
              $region80: #{tpu_custom_call.1} parent=67 // loop_footer
                %s776 = sadd.s32 %s774, 1
              $region81: #{tpu_custom_call.1} parent=67 // loop_footer_branch
                %773 = sbr.rel target = $region77
              $region82: #{tpu_custom_call.1} parent=67 // loop_exit
                _
            $region68: #{tpu_custom_call.1} parent=59 // pred_fallthru
              _
          $region60: #{tpu_custom_call.1} parent=55 // pred_fallthru
            _
          %868 = vnop
        $region56: #{tpu_custom_call.1} parent=47 // pred_fallthru
          _
      $region48: #{tpu_custom_call.1} parent=5 // pred_fallthru
        _
      %p869 = scmp.le.s32.totalorder 2, %s16
      // Predicated region
      $region105: #{tpu_custom_call.1} parent=5 // pred_check
        %p870 = pneg %p869
      $region106: #{tpu_custom_call.1} parent=5 // pred_check_branch
        %872 = sbr.rel (%p870) target = $region108
      $region107: #{tpu_custom_call.1} parent=5 // pred_region
        %s873 = ssub.s32 %s16, 2
        // Predicated region
        $region109: #{tpu_custom_call.1} parent=107 // pred_check
          %p874 = pneg %p197
        $region110: #{tpu_custom_call.1} parent=107 // pred_check_branch
          %876 = sbr.rel (%p874) target = $region112
        $region111: #{tpu_custom_call.1} parent=107 // pred_region
          %s877 = sand.u32 %s182, 1
          %s878 = sand.u32 %s182, 1
          %s879 = smul.addr %s878, 120
          %s880 = scalar_lea.vmem [#allocation4], %s879
        $region112: #{tpu_custom_call.1} parent=107 // pred_fallthru
          _
      $region108: #{tpu_custom_call.1} parent=5 // pred_fallthru
        _
    $region6: #{tpu_custom_call.1} parent=1 // loop_footer
      %s20 = sadd.s32 1, %s16
    $region7: #{tpu_custom_call.1} parent=1 // loop_footer_branch
      %15 = sbr.rel target = $region3
    $region8: #{tpu_custom_call.1} parent=1 // loop_exit
      _
    %881 = vsyncpa [#allocation3], 1
    %s882 = scalar_lea.sflag [#allocation3], 1
    %883 = vsyncpa %s882, 1

</llo_original>
